<compile_context>
chip_gen: v6e
topology: v6e:2x2x1
jax: 0.10.0
libtpu: 0.0.40
codegen_flags: <defaults>
</compile_context>

<pallas_src>
import functools

import jax
import jax.numpy as jnp
from jax.experimental import pallas as pl
from jax.experimental.pallas import tpu as pltpu

_LANES = 128
_SUBLANES = 8


def _outconv_kernel(w_ref, b_ref, x_ref, o_ref, *, c_in, c_out):
    """One (batch, spatial-tile) step of the 1x1 conv.

    w_ref : (C_out*C_in,) f32 in SMEM  (flattened scalar weights)
    b_ref : (C_out,)      f32 in SMEM
    x_ref : (C_in,  ROWS, 128) VMEM input tile   (dense sublane x lane)
    o_ref : (C_out, ROWS, 128) VMEM output tile
    """
    x = x_ref[...].astype(jnp.float32)                # (C_in, ROWS, 128), load once
    for co in range(c_out):                           # static unroll: few VPU FMAs
        acc = x[0] * w_ref[co * c_in] + b_ref[co]     # bias folded into first FMA
        for ci in range(1, c_in):
            acc = acc + x[ci] * w_ref[co * c_in + ci]
        o_ref[co] = acc.astype(o_ref.dtype)           # direct dense (ROWS,128) store


def _pick_rows_tile(r_total, n_batch, max_rows=512):
    """Pick a multiple-of-8 row tile dividing r_total (r_total % 8 == 0)."""
    rows = min(max_rows, r_total)
    rows -= rows % _SUBLANES
    rows = max(rows, _SUBLANES)
    while r_total % rows != 0:
        rows -= _SUBLANES
    # v7x has 2 TensorCores sharded over the parallel grid axes: keep >= 2 steps.
    if n_batch * (r_total // rows) < 2 and rows > _SUBLANES:
        half = rows // 2
        half -= half % _SUBLANES
        half = max(half, _SUBLANES)
        while r_total % half != 0:
            half -= _SUBLANES
        rows = half
    return rows


def outconv_forward(x_nchw, weight, bias, *, max_rows=512):
    """1x1 Conv2d forward (PyTorch OutConv semantics).

    x_nchw : (N, C_in, H, W)
    weight : (C_out, C_in, 1, 1)   (PyTorch Conv2d layout)
    bias   : (C_out,)
    returns: (N, C_out, H, W), dtype of x
    """
    N, C_in, H, W = x_nchw.shape
    C_out = weight.shape[0]
    S = H * W

    # ---- spatial layout: pad S to a lane multiple, view as (rows, 128) ------
    r_raw = -(-S // _LANES)                       # ceil(S / 128)
    if r_raw % _SUBLANES == 0 or r_raw <= max_rows:
        r_total = r_raw                           # small / already tileable
    else:
        r_total = ((r_raw + _SUBLANES - 1) // _SUBLANES) * _SUBLANES
    S_pad = r_total * _LANES

    x3 = x_nchw.reshape(N, C_in, S)               # free reshape (contiguous)
    if S_pad != S:
        x3 = jnp.pad(x3, ((0, 0), (0, 0), (0, S_pad - S)))
    x4 = x3.reshape(N, C_in, r_total, _LANES)     # free reshape (last-dim split)

    if r_total % _SUBLANES == 0:
        rows = _pick_rows_tile(r_total, N, max_rows=max_rows)
    else:
        rows = r_total                            # full-extent block is legal
    n_r = r_total // rows

    # ---- params as SMEM scalars ---------------------------------------------
    w_flat = weight.reshape(C_out * C_in).astype(jnp.float32)
    b_vec = bias.astype(jnp.float32)

    # ---- VMEM budget: double-buffered in + out tiles, capped v7x-safe --------
    dtype_bytes = jnp.dtype(x_nchw.dtype).itemsize
    tile_bytes = rows * _LANES * dtype_bytes
    pipeline_bytes = 2 * (C_in + C_out) * tile_bytes
    vmem_limit = int(min(32 * 1024 * 1024, max(4 * 1024 * 1024, 2 * pipeline_bytes)))

    kernel = functools.partial(_outconv_kernel, c_in=C_in, c_out=C_out)

    out4 = pl.pallas_call(
        kernel,
        out_shape=jax.ShapeDtypeStruct((N, C_out, r_total, _LANES), x_nchw.dtype),
        grid=(N, n_r),
        in_specs=[
            # Tiny weight/bias live in SMEM as scalars for the VPU FMAs.
            pl.BlockSpec(memory_space=pltpu.MemorySpace.SMEM),
            pl.BlockSpec(memory_space=pltpu.MemorySpace.SMEM),
            # Input tile: batch squeezed, all input channels, dense (rows,128).
            pl.BlockSpec((None, C_in, rows, _LANES), lambda n, r: (n, 0, r, 0)),
        ],
        out_specs=pl.BlockSpec((None, C_out, rows, _LANES), lambda n, r: (n, 0, r, 0)),
        compiler_params=pltpu.CompilerParams(
            # Every (batch, spatial-tile) is independent -> megacore/TC sharding.
            dimension_semantics=("parallel", "parallel"),
            vmem_limit_bytes=vmem_limit,
        ),
    )(w_flat, b_vec, x4)

    out3 = out4.reshape(N, C_out, S_pad)
    if S_pad != S:
        out3 = out3[:, :, :S]
    return out3.reshape(N, C_out, H, W)


if __name__ == "__main__":
    key = jax.random.PRNGKey(0)
    k_x, k_w, k_b = jax.random.split(key, 3)

    N, C_in, C_out, Hs, Ws = 2, 4, 3, 16, 16

    x = jax.random.normal(k_x, (N, C_in, Hs, Ws), dtype=jnp.float32)
    # Deterministic synthetic params matching nn.Conv2d(C_in, C_out, kernel_size=1).
    fan_in = C_in * 1 * 1
    bound = 1.0 / (fan_in ** 0.5)
    weight = jax.random.uniform(k_w, (C_out, C_in, 1, 1),
                                minval=-bound, maxval=bound, dtype=jnp.float32)
    bias = jax.random.uniform(k_b, (C_out,),
                              minval=-bound, maxval=bound, dtype=jnp.float32)

    y = outconv_forward(x, weight, bias)
    jax.block_until_ready(y)

    # Pure-JAX reference of the 1x1 conv semantics.
    y_ref = jnp.einsum("nchw,oc->nohw", x, weight.reshape(C_out, C_in)) \
        + bias.reshape(1, C_out, 1, 1)
    assert y.shape == (N, C_out, Hs, Ws)
    assert jnp.allclose(y, y_ref, atol=1e-5, rtol=1e-5)

    print("KERNEL_OK")
</pallas_src>

<mosaic_0001>
module attributes {stable_mosaic.version = 11 : i64} {
  func.func @_outconv_kernel(%arg0: i32, %arg1: i32, %arg2: memref<12xf32, #tpu.memory_space<smem>>, %arg3: memref<3xf32, #tpu.memory_space<smem>>, %arg4: memref<1x4x2x128xf32, #tpu.memory_space<vmem>>, %arg5: memref<1x3x2x128xf32, #tpu.memory_space<vmem>>) attributes {dimension_semantics = [#tpu.dimension_semantics<parallel>, #tpu.dimension_semantics<parallel>], iteration_bounds = array<i64: 2, 1>, scalar_prefetch = 0 : i64, scratch_operands = 0 : i64, tpu.core_type = #tpu.core_type<tc>, window_params = [{transform_indices = @transform_0, window_bounds = array<i64: 12>}, {transform_indices = @transform_1, window_bounds = array<i64: 3>}, {transform_indices = @transform_2, window_bounds = array<i64: 1, 4, 2, 128>}, {transform_indices = @transform_3, window_bounds = array<i64: 1, 3, 2, 128>}]} {
    %c0 = arith.constant 0 : index
    %c0_0 = arith.constant 0 : index
    %c0_1 = arith.constant 0 : index
    %c0_2 = arith.constant 0 : index
    %0 = vector.load %arg4[%c0, %c0_0, %c0_1, %c0_2] : memref<1x4x2x128xf32, #tpu.memory_space<vmem>>, vector<1x4x2x128xf32>
    %1 = vector.shape_cast %0 : vector<1x4x2x128xf32> to vector<4x2x128xf32>
    %2 = vector.extract_strided_slice %1 {offsets = [0, 0, 0], sizes = [1, 2, 128], strides = [1, 1, 1]} : vector<4x2x128xf32> to vector<1x2x128xf32>
    %3 = vector.shape_cast %2 : vector<1x2x128xf32> to vector<2x128xf32>
    %c0_3 = arith.constant 0 : index
    %4 = memref.load %arg2[%c0_3] : memref<12xf32, #tpu.memory_space<smem>>
    %5 = vector.broadcast %4 : f32 to vector<2x128xf32>
    %6 = arith.mulf %3, %5 : vector<2x128xf32>
    %c0_4 = arith.constant 0 : index
    %7 = memref.load %arg3[%c0_4] : memref<3xf32, #tpu.memory_space<smem>>
    %8 = vector.broadcast %7 : f32 to vector<2x128xf32>
    %9 = arith.addf %6, %8 : vector<2x128xf32>
    %10 = vector.extract_strided_slice %1 {offsets = [1, 0, 0], sizes = [1, 2, 128], strides = [1, 1, 1]} : vector<4x2x128xf32> to vector<1x2x128xf32>
    %11 = vector.shape_cast %10 : vector<1x2x128xf32> to vector<2x128xf32>
    %c1 = arith.constant 1 : index
    %12 = memref.load %arg2[%c1] : memref<12xf32, #tpu.memory_space<smem>>
    %13 = vector.broadcast %12 : f32 to vector<2x128xf32>
    %14 = arith.mulf %11, %13 : vector<2x128xf32>
    %15 = arith.addf %9, %14 : vector<2x128xf32>
    %16 = vector.extract_strided_slice %1 {offsets = [2, 0, 0], sizes = [1, 2, 128], strides = [1, 1, 1]} : vector<4x2x128xf32> to vector<1x2x128xf32>
    %17 = vector.shape_cast %16 : vector<1x2x128xf32> to vector<2x128xf32>
    %c2 = arith.constant 2 : index
    %18 = memref.load %arg2[%c2] : memref<12xf32, #tpu.memory_space<smem>>
    %19 = vector.broadcast %18 : f32 to vector<2x128xf32>
    %20 = arith.mulf %17, %19 : vector<2x128xf32>
    %21 = arith.addf %15, %20 : vector<2x128xf32>
    %22 = vector.extract_strided_slice %1 {offsets = [3, 0, 0], sizes = [1, 2, 128], strides = [1, 1, 1]} : vector<4x2x128xf32> to vector<1x2x128xf32>
    %23 = vector.shape_cast %22 : vector<1x2x128xf32> to vector<2x128xf32>
    %c3 = arith.constant 3 : index
    %24 = memref.load %arg2[%c3] : memref<12xf32, #tpu.memory_space<smem>>
    %25 = vector.broadcast %24 : f32 to vector<2x128xf32>
    %26 = arith.mulf %23, %25 : vector<2x128xf32>
    %27 = arith.addf %21, %26 : vector<2x128xf32>
    %c0_5 = arith.constant 0 : index
    %c0_6 = arith.constant 0 : index
    %c0_7 = arith.constant 0 : index
    %c0_8 = arith.constant 0 : index
    %28 = vector.load %arg5[%c0_5, %c0_6, %c0_7, %c0_8] : memref<1x3x2x128xf32, #tpu.memory_space<vmem>>, vector<1x1x2x128xf32>
    %29 = vector.shape_cast %28 : vector<1x1x2x128xf32> to vector<2x128xf32>
    %30 = vector.shape_cast %27 : vector<2x128xf32> to vector<1x1x2x128xf32>
    tpu.vector_store %arg5[%c0_5, %c0_6, %c0_7, %c0_8], %30 {strides = array<i32>} : memref<1x3x2x128xf32, #tpu.memory_space<vmem>>, vector<1x1x2x128xf32>,
    %31 = vector.extract_strided_slice %1 {offsets = [0, 0, 0], sizes = [1, 2, 128], strides = [1, 1, 1]} : vector<4x2x128xf32> to vector<1x2x128xf32>
    %32 = vector.shape_cast %31 : vector<1x2x128xf32> to vector<2x128xf32>
    %c4 = arith.constant 4 : index
    %33 = memref.load %arg2[%c4] : memref<12xf32, #tpu.memory_space<smem>>
    %34 = vector.broadcast %33 : f32 to vector<2x128xf32>
    %35 = arith.mulf %32, %34 : vector<2x128xf32>
    %c1_9 = arith.constant 1 : index
    %36 = memref.load %arg3[%c1_9] : memref<3xf32, #tpu.memory_space<smem>>
    %37 = vector.broadcast %36 : f32 to vector<2x128xf32>
    %38 = arith.addf %35, %37 : vector<2x128xf32>
    %39 = vector.extract_strided_slice %1 {offsets = [1, 0, 0], sizes = [1, 2, 128], strides = [1, 1, 1]} : vector<4x2x128xf32> to vector<1x2x128xf32>
    %40 = vector.shape_cast %39 : vector<1x2x128xf32> to vector<2x128xf32>
    %c5 = arith.constant 5 : index
    %41 = memref.load %arg2[%c5] : memref<12xf32, #tpu.memory_space<smem>>
    %42 = vector.broadcast %41 : f32 to vector<2x128xf32>
    %43 = arith.mulf %40, %42 : vector<2x128xf32>
    %44 = arith.addf %38, %43 : vector<2x128xf32>
    %45 = vector.extract_strided_slice %1 {offsets = [2, 0, 0], sizes = [1, 2, 128], strides = [1, 1, 1]} : vector<4x2x128xf32> to vector<1x2x128xf32>
    %46 = vector.shape_cast %45 : vector<1x2x128xf32> to vector<2x128xf32>
    %c6 = arith.constant 6 : index
    %47 = memref.load %arg2[%c6] : memref<12xf32, #tpu.memory_space<smem>>
    %48 = vector.broadcast %47 : f32 to vector<2x128xf32>
    %49 = arith.mulf %46, %48 : vector<2x128xf32>
    %50 = arith.addf %44, %49 : vector<2x128xf32>
    %51 = vector.extract_strided_slice %1 {offsets = [3, 0, 0], sizes = [1, 2, 128], strides = [1, 1, 1]} : vector<4x2x128xf32> to vector<1x2x128xf32>
    %52 = vector.shape_cast %51 : vector<1x2x128xf32> to vector<2x128xf32>
    %c7 = arith.constant 7 : index
    %53 = memref.load %arg2[%c7] : memref<12xf32, #tpu.memory_space<smem>>
    %54 = vector.broadcast %53 : f32 to vector<2x128xf32>
    %55 = arith.mulf %52, %54 : vector<2x128xf32>
    %56 = arith.addf %50, %55 : vector<2x128xf32>
    %c0_10 = arith.constant 0 : index
    %c1_11 = arith.constant 1 : index
    %c0_12 = arith.constant 0 : index
    %c0_13 = arith.constant 0 : index
    %57 = vector.load %arg5[%c0_10, %c1_11, %c0_12, %c0_13] : memref<1x3x2x128xf32, #tpu.memory_space<vmem>>, vector<1x1x2x128xf32>
    %58 = vector.shape_cast %57 : vector<1x1x2x128xf32> to vector<2x128xf32>
    %59 = vector.shape_cast %56 : vector<2x128xf32> to vector<1x1x2x128xf32>
    tpu.vector_store %arg5[%c0_10, %c1_11, %c0_12, %c0_13], %59 {strides = array<i32>} : memref<1x3x2x128xf32, #tpu.memory_space<vmem>>, vector<1x1x2x128xf32>,
    %60 = vector.extract_strided_slice %1 {offsets = [0, 0, 0], sizes = [1, 2, 128], strides = [1, 1, 1]} : vector<4x2x128xf32> to vector<1x2x128xf32>
    %61 = vector.shape_cast %60 : vector<1x2x128xf32> to vector<2x128xf32>
    %c8 = arith.constant 8 : index
    %62 = memref.load %arg2[%c8] : memref<12xf32, #tpu.memory_space<smem>>
    %63 = vector.broadcast %62 : f32 to vector<2x128xf32>
    %64 = arith.mulf %61, %63 : vector<2x128xf32>
    %c2_14 = arith.constant 2 : index
    %65 = memref.load %arg3[%c2_14] : memref<3xf32, #tpu.memory_space<smem>>
    %66 = vector.broadcast %65 : f32 to vector<2x128xf32>
    %67 = arith.addf %64, %66 : vector<2x128xf32>
    %68 = vector.extract_strided_slice %1 {offsets = [1, 0, 0], sizes = [1, 2, 128], strides = [1, 1, 1]} : vector<4x2x128xf32> to vector<1x2x128xf32>
    %69 = vector.shape_cast %68 : vector<1x2x128xf32> to vector<2x128xf32>
    %c9 = arith.constant 9 : index
    %70 = memref.load %arg2[%c9] : memref<12xf32, #tpu.memory_space<smem>>
    %71 = vector.broadcast %70 : f32 to vector<2x128xf32>
    %72 = arith.mulf %69, %71 : vector<2x128xf32>
    %73 = arith.addf %67, %72 : vector<2x128xf32>
    %74 = vector.extract_strided_slice %1 {offsets = [2, 0, 0], sizes = [1, 2, 128], strides = [1, 1, 1]} : vector<4x2x128xf32> to vector<1x2x128xf32>
    %75 = vector.shape_cast %74 : vector<1x2x128xf32> to vector<2x128xf32>
    %c10 = arith.constant 10 : index
    %76 = memref.load %arg2[%c10] : memref<12xf32, #tpu.memory_space<smem>>
    %77 = vector.broadcast %76 : f32 to vector<2x128xf32>
    %78 = arith.mulf %75, %77 : vector<2x128xf32>
    %79 = arith.addf %73, %78 : vector<2x128xf32>
    %80 = vector.extract_strided_slice %1 {offsets = [3, 0, 0], sizes = [1, 2, 128], strides = [1, 1, 1]} : vector<4x2x128xf32> to vector<1x2x128xf32>
    %81 = vector.shape_cast %80 : vector<1x2x128xf32> to vector<2x128xf32>
    %c11 = arith.constant 11 : index
    %82 = memref.load %arg2[%c11] : memref<12xf32, #tpu.memory_space<smem>>
    %83 = vector.broadcast %82 : f32 to vector<2x128xf32>
    %84 = arith.mulf %81, %83 : vector<2x128xf32>
    %85 = arith.addf %79, %84 : vector<2x128xf32>
    %c0_15 = arith.constant 0 : index
    %c2_16 = arith.constant 2 : index
    %c0_17 = arith.constant 0 : index
    %c0_18 = arith.constant 0 : index
    %86 = vector.load %arg5[%c0_15, %c2_16, %c0_17, %c0_18] : memref<1x3x2x128xf32, #tpu.memory_space<vmem>>, vector<1x1x2x128xf32>
    %87 = vector.shape_cast %86 : vector<1x1x2x128xf32> to vector<2x128xf32>
    %88 = vector.shape_cast %85 : vector<2x128xf32> to vector<1x1x2x128xf32>
    tpu.vector_store %arg5[%c0_15, %c2_16, %c0_17, %c0_18], %88 {strides = array<i32>} : memref<1x3x2x128xf32, #tpu.memory_space<vmem>>, vector<1x1x2x128xf32>,
    return
  }
  func.func @transform_0(%arg0: i32, %arg1: i32) -> i32 {
    %c0_i32 = arith.constant 0 : i32
    %c0_i32_0 = arith.constant 0 : i32
    return %c0_i32 : i32
  }
  func.func @transform_1(%arg0: i32, %arg1: i32) -> i32 {
    %c0_i32 = arith.constant 0 : i32
    %c0_i32_0 = arith.constant 0 : i32
    return %c0_i32 : i32
  }
  func.func @transform_2(%arg0: i32, %arg1: i32) -> (i32, i32, i32, i32) {
    %c0_i32 = arith.constant 0 : i32
    %c0_i32_0 = arith.constant 0 : i32
    %c0_i32_1 = arith.constant 0 : i32
    return %arg0, %c0_i32, %arg1, %c0_i32_0 : i32, i32, i32, i32
  }
  func.func @transform_3(%arg0: i32, %arg1: i32) -> (i32, i32, i32, i32) {
    %c0_i32 = arith.constant 0 : i32
    %c0_i32_0 = arith.constant 0 : i32
    %c0_i32_1 = arith.constant 0 : i32
    return %arg0, %c0_i32, %arg1, %c0_i32_0 : i32, i32, i32, i32
  }
}

</mosaic_0001>

<llo_original>
// kernel: tpu_custom_call.1
$region0: #{tpu_custom_call.1}
  #allocation0 [shape = 'u32[]', space=smem, size = 0x4, offset = 0x4, fixed_abs, tag = 'smem constant byte address 0x4 - core index']
  #allocation1 [shape = 'u32[144,128]{1,0:T(1,128)}', space=vmem, size = 0x12000, scoped, tag = 'internal scratch']
  %s0 = inlined_call_operand.hbm [shape: f32[12], index: 0, kind: input, shape index: {}]
  %s1 = inlined_call_operand.vmem [shape: f32[3], index: 1, kind: input, shape index: {}]
  %s2 = inlined_call_operand.hbm [shape: f32[2,4,2,128], index: 2, kind: input, shape index: {}]
  %s3 = inlined_call_operand.hbm [shape: f32[2,3,2,128], index: 3, kind: output, shape index: {}]
  %s4 = sld [smem:[#allocation0]]
  $region57: #{tpu_custom_call.1} parent=0
    _
  %s6 = ssub.s32 1, %s4
  %s7 = scalar_select 0, %s6, %s4
  $region1: #{tpu_custom_call.1} parent=0
    #allocation2 [shape = 'u8[512]{0}', space=smem, size = 0x200, scoped, tag = 'input window, operand 0, single buffered']
    #allocation3 [shape = 's32[2]{0}', space=sflag, size = 0x8, scoped, tag = 'scoped memory for tpu_custom_call.1']
    #allocation4 [shape = 's32[2]{0}', space=sflag, size = 0x8, scoped, tag = 'scoped memory for tpu_custom_call.1']
    #allocation5 [shape = 's32[2]{0}', space=sflag, size = 0x8, scoped, tag = 'scoped memory for tpu_custom_call.1']
    #allocation6 [shape = 's32[2]{0}', space=sflag, size = 0x8, scoped, tag = 'scoped memory for tpu_custom_call.1']
    #allocation7 [shape = 'u8[512]{0}', space=smem, size = 0x200, scoped, tag = 'input window, operand 1, single buffered']
    #allocation8 [shape = 'u8[8192]{0}', space=vmem, size = 0x2000, scoped, tag = 'input window, operand 2']
    #allocation9 [shape = 'u8[6144]{0}', space=vmem, size = 0x1800, scoped, tag = 'output window, operand 0']
    %8 = vsyncpa [#allocation5], 0
    %9 = vsyncpa [#allocation6], 0
    %10 = vsyncpa [#allocation3], 0
    %s11 = scalar_lea.sflag [#allocation3], 1
    %12 = vsyncpa %s11, 0
    %13 = vsyncpa [#allocation4], 0
    %s14 = scalar_lea.sflag [#allocation4], 1
    %15 = vsyncpa %s14, 0
    loop: start=0, step=1, limit=4
    $region2: #{tpu_custom_call.1} parent=1 // loop_pre_header
      _
    $region3: #{tpu_custom_call.1} parent=1 // loop_header
      %s17 = sphi 0, %s21
      %p18 = scmp.ge.s32.totalorder %s17, 4
      %s24 = sphi 0, %s36
      %s25 = sphi 0, %s32
      %s26 = sphi 0, %s24
      %s27 = sphi 0, %s25
      %s28 = sphi 0, %s26
      %s29 = sphi 0, %s27
      %s37 = sphi 0, %s37
      %s39 = sphi 0, %s37
      %s40 = sphi 0, %s39
      %s54 = sphi 0, %s40
      %s58 = sphi 0, %s58
      %s60 = sphi 0, %s58
      %s61 = sphi 0, %s60
      %s75 = sphi 0, %s61
      %s83 = sphi 0, %s85
      %s86 = sphi 0, %s83
      %s87 = sphi 0, %s86
      %s103 = sphi 0, %s87
      %s111 = sphi 0, %s113
      %s114 = sphi 0, %s111
      %s115 = sphi 0, %s114
      %s131 = sphi 0, %s115
    $region4: #{tpu_custom_call.1} parent=1 // loop_header_branch
      %20 = sbr.rel (%p18) target = $region8
    $region5: #{tpu_custom_call.1} parent=1 // loop_body
      %s22 = ssub.s32 %s17, 1
      %s23 = ssub.s32 %s17, 2
      %s30 = sadd.s32 1, %s25
      %p31 = scmp.ge.s32.totalorder %s30, 1
      %s32 = scalar_select %p31, 0, %s30
      %s33 = sadd.s32 1, %s24
      %s34 = scalar_select %p31, %s33, %s24
      %p35 = scmp.ge.s32.totalorder %s34, 2
      %s36 = scalar_select %p35, 0, %s34
      %s38 = sadd.s32 %s37, 1
      %p41 = scmp.eq.s32.totalorder %s17, 1
      %p42 = scmp.ne.s32.totalorder %s37, %s39
      %p43 = scmp.eq.s32.totalorder %s17, 0
      %p44 = por %p42, %p43
      %p45 = scmp.ne.s32.totalorder %s37, %s39
      %p46 = scmp.eq.s32.totalorder %s22, 1
      %p47 = por %p45, %p46
      %p48 = scmp.ne.s32.totalorder %s39, %s40
      %p49 = scmp.eq.s32.totalorder %s22, 0
      %p50 = por %p48, %p49
      %p51 = scmp.ne.s32.totalorder %s39, %s40
      %p52 = scmp.eq.s32.totalorder %s23, 1
      %p53 = por %p51, %p52
      %p55 = scmp.ne.s32.totalorder %s40, %s54
      %p56 = scmp.eq.s32.totalorder %s23, 0
      %p57 = por %p55, %p56
      %s59 = sadd.s32 %s58, 1
      %p62 = scmp.eq.s32.totalorder %s17, 1
      %p63 = scmp.ne.s32.totalorder %s58, %s60
      %p64 = scmp.eq.s32.totalorder %s17, 0
      %p65 = por %p63, %p64
      %p66 = scmp.ne.s32.totalorder %s58, %s60
      %p67 = scmp.eq.s32.totalorder %s22, 1
      %p68 = por %p66, %p67
      %p69 = scmp.ne.s32.totalorder %s60, %s61
      %p70 = scmp.eq.s32.totalorder %s22, 0
      %p71 = por %p69, %p70
      %p72 = scmp.ne.s32.totalorder %s60, %s61
      %p73 = scmp.eq.s32.totalorder %s23, 1
      %p74 = por %p72, %p73
      %p76 = scmp.ne.s32.totalorder %s61, %s75
      %p77 = scmp.eq.s32.totalorder %s23, 0
      %p78 = por %p76, %p77
      %s79 = ssub.s32 %s24, %s36
      %s80 = ssub.s32 %s25, %s32
      %s81 = sor.u32 %s79, %s80
      %p82 = scmp.eq.s32.totalorder %s81, 0
      %s84 = sadd.s32 %s83, 1
      %s85 = scalar_select %p82, %s83, %s84
      %p88 = pneg %p82
      %p89 = scmp.eq.s32.totalorder %s17, 1
      %p90 = por %p88, %p89
      %p91 = scmp.ne.s32.totalorder %s83, %s86
      %p92 = scmp.eq.s32.totalorder %s17, 0
      %p93 = por %p91, %p92
      %p94 = scmp.ne.s32.totalorder %s83, %s86
      %p95 = scmp.eq.s32.totalorder %s22, 1
      %p96 = por %p94, %p95
      %p97 = scmp.ne.s32.totalorder %s86, %s87
      %p98 = scmp.eq.s32.totalorder %s22, 0
      %p99 = por %p97, %p98
      %p100 = scmp.ne.s32.totalorder %s86, %s87
      %p101 = scmp.eq.s32.totalorder %s23, 1
      %p102 = por %p100, %p101
      %p104 = scmp.ne.s32.totalorder %s87, %s103
      %p105 = scmp.eq.s32.totalorder %s23, 0
      %p106 = por %p104, %p105
      %s107 = ssub.s32 %s24, %s36
      %s108 = ssub.s32 %s25, %s32
      %s109 = sor.u32 %s107, %s108
      %p110 = scmp.eq.s32.totalorder %s109, 0
      %s112 = sadd.s32 %s111, 1
      %s113 = scalar_select %p110, %s111, %s112
      %p116 = pneg %p110
      %p117 = scmp.eq.s32.totalorder %s17, 1
      %p118 = por %p116, %p117
      %p119 = scmp.ne.s32.totalorder %s111, %s114
      %p120 = scmp.eq.s32.totalorder %s17, 0
      %p121 = por %p119, %p120
      %p122 = scmp.ne.s32.totalorder %s111, %s114
      %p123 = scmp.eq.s32.totalorder %s22, 1
      %p124 = por %p122, %p123
      %p125 = scmp.ne.s32.totalorder %s114, %s115
      %p126 = scmp.eq.s32.totalorder %s22, 0
      %p127 = por %p125, %p126
      %p128 = scmp.ne.s32.totalorder %s114, %s115
      %p129 = scmp.eq.s32.totalorder %s23, 1
      %p130 = por %p128, %p129
      %p132 = scmp.ne.s32.totalorder %s115, %s131
      %p133 = scmp.eq.s32.totalorder %s23, 0
      %p134 = por %p132, %p133
      %p135 = scmp.le.s32.totalorder 1, %s17
      %p136 = scmp.lt.s32.totalorder %s17, 3
      %p137 = pnand %p135, %p136
      %p138 = pneg %p137
      // Predicated region
      $region9: #{tpu_custom_call.1} parent=5 // pred_check
        _
      $region10: #{tpu_custom_call.1} parent=5 // pred_check_branch
        %140 = sbr.rel (%p137) target = $region12
      $region11: #{tpu_custom_call.1} parent=5 // pred_region
        %s141 = ssub.s32 %s17, 1
        // Predicated region
        $region13: #{tpu_custom_call.1} parent=11 // pred_check
          %p142 = pneg %p50
        $region14: #{tpu_custom_call.1} parent=11 // pred_check_branch
          %144 = sbr.rel (%p142) target = $region16
        $region15: #{tpu_custom_call.1} parent=11 // pred_region
          %s146 = ssub.s32 16, 16
          %147 = vsyncadd [#allocation5], %s146
          %150 = dma.hbm_to_smem %s0, 16, [#allocation2], [#allocation5]
        $region16: #{tpu_custom_call.1} parent=11 // pred_fallthru
          _
        // Predicated region
        $region17: #{tpu_custom_call.1} parent=11 // pred_check
          %p151 = pneg %p71
        $region18: #{tpu_custom_call.1} parent=11 // pred_check_branch
          %153 = sbr.rel (%p151) target = $region20
        $region19: #{tpu_custom_call.1} parent=11 // pred_region
          %s155 = ssub.s32 16, 16
          %156 = vsyncadd [#allocation6], %s155
          %s158 = sshll.u32 %s1, 4
          %s159 = int_to_ptr.vmem [resolvable:$true] %s158
          %161 = dma.vmem_to_smem %s159, 16, [#allocation7], [#allocation6]
        $region20: #{tpu_custom_call.1} parent=11 // pred_fallthru
          _
      $region12: #{tpu_custom_call.1} parent=5 // pred_fallthru
        _
      %p162 = scmp.lt.s32.totalorder %s17, 2
      // Predicated region
      $region21: #{tpu_custom_call.1} parent=5 // pred_check
        %p163 = pneg %p162
      $region22: #{tpu_custom_call.1} parent=5 // pred_check_branch
        %165 = sbr.rel (%p163) target = $region24
      $region23: #{tpu_custom_call.1} parent=5 // pred_region
        // Predicated region
        $region25: #{tpu_custom_call.1} parent=23 // pred_check
          %p166 = pneg %p93
        $region26: #{tpu_custom_call.1} parent=23 // pred_check_branch
          %168 = sbr.rel (%p166) target = $region28
        $region27: #{tpu_custom_call.1} parent=23 // pred_region
          %s169 = sand.u32 %s83, 1
          %s170 = scalar_lea.sflag [#allocation3], %s169
          %s171 = sand.u32 %s83, 1
          %s172 = smul.addr %s171, 8
          %s173 = scalar_lea.vmem [#allocation8], %s172
          %s175 = ssub.s32 128, 128
          %176 = vsyncadd %s170, %s175
          %s177 = smul.addr %s24, 4
          %s178 = sadd.s32 %s25, %s177
          %s179 = smul.addr %s178, 32
          %s180 = scalar_lea.hbm %s2, %s179
          %s181 = sshll.u32 %s173, 4
          %s182 = int_to_ptr.vmem [resolvable:$true] %s181
          %187 = dma.hbm_to_vmem [thread:$0]  %s180, 128, %s182, %s170, 32, 32, 2
        $region28: #{tpu_custom_call.1} parent=23 // pred_fallthru
          _
      $region24: #{tpu_custom_call.1} parent=5 // pred_fallthru
        _
      %p188 = scmp.le.s32.totalorder 1, %s17
      %p189 = scmp.lt.s32.totalorder %s17, 3
      %p190 = pnand %p188, %p189
      %p191 = pneg %p190
      // Predicated region
      $region29: #{tpu_custom_call.1} parent=5 // pred_check
        _
      $region30: #{tpu_custom_call.1} parent=5 // pred_check_branch
        %193 = sbr.rel (%p190) target = $region32
      $region31: #{tpu_custom_call.1} parent=5 // pred_region
        %s194 = ssub.s32 %s17, 1
        // Predicated region
        $region33: #{tpu_custom_call.1} parent=31 // pred_check
          %p195 = pneg %p50
        $region34: #{tpu_custom_call.1} parent=31 // pred_check_branch
          %197 = sbr.rel (%p195) target = $region36
        $region35: #{tpu_custom_call.1} parent=31 // pred_region
          %198 = dma.done [#allocation5], 16
        $region36: #{tpu_custom_call.1} parent=31 // pred_fallthru
          _
        // Predicated region
        $region37: #{tpu_custom_call.1} parent=31 // pred_check
          %p199 = pneg %p71
        $region38: #{tpu_custom_call.1} parent=31 // pred_check_branch
          %201 = sbr.rel (%p199) target = $region40
        $region39: #{tpu_custom_call.1} parent=31 // pred_region
          %202 = dma.done [#allocation6], 16
        $region40: #{tpu_custom_call.1} parent=31 // pred_fallthru
          _
        %s203 = sand.u32 %s86, 1
        %s204 = scalar_lea.sflag [#allocation3], %s203
        %s205 = sand.u32 %s86, 1
        %s206 = smul.addr %s205, 8
        %s207 = scalar_lea.vmem [#allocation8], %s206
        // Predicated region
        $region41: #{tpu_custom_call.1} parent=31 // pred_check
          %p208 = pneg %p99
        $region42: #{tpu_custom_call.1} parent=31 // pred_check_branch
          %210 = sbr.rel (%p208) target = $region44
        $region43: #{tpu_custom_call.1} parent=31 // pred_region
          %211 = dma.done %s204, 128
        $region44: #{tpu_custom_call.1} parent=31 // pred_fallthru
          _
        %212 = sfence
        %p213 = pneg %p50
        %p214 = pneg %p47
        %p215 = pneg %p71
        %p216 = pneg %p68
        %s217 = sand.u32 %s86, 1
        %s218 = scalar_lea.sflag [#allocation3], %s217
        %s219 = sand.u32 %s86, 1
        %s220 = smul.addr %s219, 8
        %s221 = scalar_lea.vmem [#allocation8], %s220
        %p222 = pneg %p99
        %p223 = pneg %p96
        %p224 = pneg %p127
        %p225 = pneg %p124
        %s226 = sand.u32 %s114, 1
        %s227 = scalar_lea.sflag [#allocation4], %s226
        %s228 = sand.u32 %s114, 1
        %s229 = smul.addr %s228, 6
        %s230 = scalar_lea.vmem [#allocation9], %s229
        %v231 = vld [vmem:[%s207] sm:$0x3]
        %v232 = vld [vmem:[%s207 + $0x2] sm:$0x3]
        %v233 = vld [vmem:[%s207 + $0x4] sm:$0x3]
        %v234 = vld [vmem:[%s207 + $0x6] sm:$0x3]
        %s235 = sld [smem:[#allocation2]]
        %v236 = vstv %s235
        %v237 = vmul.f32 %v231, %v236
        %s238 = sld [smem:[#allocation7]]
        %v239 = vstv %s238
        %v240 = vadd.f32 %v237, %v239
        %s241 = sld [smem:[#allocation2 + $0x1]]
        %v242 = vstv %s241
        %v243 = vmul.f32 %v232, %v242
        %v244 = vadd.f32 %v240, %v243
        %s245 = sld [smem:[#allocation2 + $0x2]]
        %v246 = vstv %s245
        %v247 = vmul.f32 %v233, %v246
        %v248 = vadd.f32 %v244, %v247
        %s249 = sld [smem:[#allocation2 + $0x3]]
        %v250 = vstv %s249
        %v251 = vmul.f32 %v234, %v250
        %v252 = vadd.f32 %v248, %v251
        %253 = vst [vmem:[%s230] sm:$0x3] %v252
        %s254 = sld [smem:[#allocation2 + $0x4]]
        %v255 = vstv %s254
        %v256 = vmul.f32 %v231, %v255
        %s257 = sld [smem:[#allocation7 + $0x1]]
        %v258 = vstv %s257
        %v259 = vadd.f32 %v256, %v258
        %s260 = sld [smem:[#allocation2 + $0x5]]
        %v261 = vstv %s260
        %v262 = vmul.f32 %v232, %v261
        %v263 = vadd.f32 %v259, %v262
        %s264 = sld [smem:[#allocation2 + $0x6]]
        %v265 = vstv %s264
        %v266 = vmul.f32 %v233, %v265
        %v267 = vadd.f32 %v263, %v266
        %s268 = sld [smem:[#allocation2 + $0x7]]
        %v269 = vstv %s268
        %v270 = vmul.f32 %v234, %v269
        %v271 = vadd.f32 %v267, %v270
        %s272 = scalar_lea.vmem %s230, 2 [#allocation9]
        %273 = vst [vmem:[%s272] sm:$0x3] %v271
        %s274 = sld [smem:[#allocation2 + $0x8]]
        %v275 = vstv %s274
        %v276 = vmul.f32 %v231, %v275
        %s277 = sld [smem:[#allocation7 + $0x2]]
        %v278 = vstv %s277
        %v279 = vadd.f32 %v276, %v278
        %s280 = sld [smem:[#allocation2 + $0x9]]
        %v281 = vstv %s280
        %v282 = vmul.f32 %v232, %v281
        %v283 = vadd.f32 %v279, %v282
        %s284 = sld [smem:[#allocation2 + $0xa]]
        %v285 = vstv %s284
        %v286 = vmul.f32 %v233, %v285
        %v287 = vadd.f32 %v283, %v286
        %s288 = sld [smem:[#allocation2 + $0xb]]
        %v289 = vstv %s288
        %v290 = vmul.f32 %v234, %v289
        %v291 = vadd.f32 %v287, %v290
        %s292 = scalar_lea.vmem %s230, 4 [#allocation9]
        %293 = vst [vmem:[%s292] sm:$0x3] %v291
        %s294 = sand.u32 %s114, 1
        %s295 = scalar_lea.sflag [#allocation4], %s294
        %s296 = sand.u32 %s114, 1
        %s297 = smul.addr %s296, 6
        %s298 = scalar_lea.vmem [#allocation9], %s297
        // Predicated region
        $region45: #{tpu_custom_call.1} parent=31 // pred_check
          %p299 = pneg %p124
        $region46: #{tpu_custom_call.1} parent=31 // pred_check_branch
          %301 = sbr.rel (%p299) target = $region48
        $region47: #{tpu_custom_call.1} parent=31 // pred_region
          %s303 = ssub.s32 96, 96
          %304 = vsyncadd %s295, %s303
          %s305 = smul.addr %s26, 3
          %s306 = sadd.s32 %s27, %s305
          %s307 = smul.addr %s306, 32
          %s308 = scalar_lea.hbm %s3, %s307
          %s309 = sshll.u32 %s298, 4
          %s310 = int_to_ptr.vmem [resolvable:$true] %s309
          %315 = dma.vmem_to_hbm [thread:$0]  %s310, 96, %s308, %s295, 32, 32, 2
        $region48: #{tpu_custom_call.1} parent=31 // pred_fallthru
          _
      $region32: #{tpu_custom_call.1} parent=5 // pred_fallthru
        _
      %p316 = scmp.le.s32.totalorder 2, %s17
      // Predicated region
      $region49: #{tpu_custom_call.1} parent=5 // pred_check
        %p317 = pneg %p316
      $region50: #{tpu_custom_call.1} parent=5 // pred_check_branch
        %319 = sbr.rel (%p317) target = $region52
      $region51: #{tpu_custom_call.1} parent=5 // pred_region
        %s320 = ssub.s32 %s17, 2
        // Predicated region
        $region53: #{tpu_custom_call.1} parent=51 // pred_check
          %p321 = pneg %p130
        $region54: #{tpu_custom_call.1} parent=51 // pred_check_branch
          %323 = sbr.rel (%p321) target = $region56
        $region55: #{tpu_custom_call.1} parent=51 // pred_region
          %s324 = sand.u32 %s115, 1
          %s325 = scalar_lea.sflag [#allocation4], %s324
          %s326 = sand.u32 %s115, 1
          %s327 = smul.addr %s326, 6
          %s328 = scalar_lea.vmem [#allocation9], %s327
          %329 = dma.done %s325, 96
        $region56: #{tpu_custom_call.1} parent=51 // pred_fallthru
          _
      $region52: #{tpu_custom_call.1} parent=5 // pred_fallthru
        _
    $region6: #{tpu_custom_call.1} parent=1 // loop_footer
      %s21 = sadd.s32 1, %s17
    $region7: #{tpu_custom_call.1} parent=1 // loop_footer_branch
      %16 = sbr.rel target = $region3
    $region8: #{tpu_custom_call.1} parent=1 // loop_exit
      _
    %330 = vsyncpa [#allocation3], 1
    %s331 = scalar_lea.sflag [#allocation3], 1
    %332 = vsyncpa %s331, 1
    %333 = vsyncpa [#allocation4], 1
    %s334 = scalar_lea.sflag [#allocation4], 1
    %335 = vsyncpa %s334, 1
    %336 = vsyncpa [#allocation5], 1
    %s337 = scalar_lea.sflag [#allocation5], 1
    %338 = vsyncpa %s337, 1
    %339 = vsyncpa [#allocation6], 1
    %s340 = scalar_lea.sflag [#allocation6], 1
    %341 = vsyncpa %s340, 1

</llo_original>
